<compile_context>
chip_gen: v6e
topology: v6e:2x2x1
jax: 0.10.0
libtpu: 0.0.40
codegen_flags: <defaults>
</compile_context>

<pallas_src>
import jax
import jax.numpy as jnp
import numpy as np
from jax.experimental import pallas as pl
from jax.experimental.pallas import tpu as pltpu


def _mapping_kernel(x_ref, w_ref, scale_ref, shift_ref, o_ref):
    # x_ref:     (C_in, TM)    pixels: channels on sublanes, batch*spatial on lanes
    # w_ref:     (C_out, C_in) 1x1 conv weight
    # scale_ref: (C_out, 1)    gamma / sqrt(running_var + eps)
    # shift_ref: (C_out, 1)    beta - running_mean * scale
    # o_ref:     (C_out, TM)   lane-dense output slab
    w_eff = w_ref[...] * scale_ref[...]          # fold BN scale into the conv weight
    y = jnp.dot(w_eff, x_ref[...], preferred_element_type=jnp.float32)
    o_ref[...] = (y + shift_ref[...]).astype(o_ref.dtype)


def mapping_forward(x, w, gamma, beta, running_mean, running_var,
                    *, eps=1e-5, max_tile_m=4096):
    """x: (B, C_in, H, W) NCHW.  w: (C_out, C_in) (= Conv2d weight squeezed).
    gamma/beta/running_mean/running_var: (C_out,)."""
    B, C_in, H, W = x.shape
    C_out = w.shape[0]
    M = B * H * W

    # Lane-dense slab: (C_in, B*H*W).  Pad the pixel axis to a multiple of 128
    # (padded zero columns are independent and sliced away afterwards).
    x2d = x.transpose(1, 0, 2, 3).reshape(C_in, M)
    M_pad = ((M + 127) // 128) * 128
    if M_pad != M:
        x2d = jnp.pad(x2d, ((0, 0), (0, M_pad - M)))

    # Largest tile that divides M_pad: a single grid step for small problems.
    tile_m = M_pad
    if tile_m > max_tile_m:
        tile_m = max_tile_m
        while M_pad % tile_m:
            tile_m -= 128
    grid = (M_pad // tile_m,)

    # Fold BatchNorm (inference) into a per-channel scale/shift (done once,
    # outside the kernel: tiny, and never re-broadcast inside a loop).
    inv_std = jax.lax.rsqrt(running_var.astype(jnp.float32) + eps)
    scale = (gamma * inv_std).reshape(C_out, 1).astype(jnp.float32)
    shift = (beta - running_mean * gamma * inv_std).reshape(C_out, 1).astype(jnp.float32)

    out2d = pl.pallas_call(
        _mapping_kernel,
        out_shape=jax.ShapeDtypeStruct((C_out, M_pad), x.dtype),
        grid_spec=pltpu.PrefetchScalarGridSpec(
            num_scalar_prefetch=0,
            grid=grid,
            in_specs=[
                pl.BlockSpec((C_in, tile_m), lambda i: (0, i)),
                pl.BlockSpec((C_out, C_in), lambda i: (0, 0)),
                pl.BlockSpec((C_out, 1), lambda i: (0, 0)),
                pl.BlockSpec((C_out, 1), lambda i: (0, 0)),
            ],
            out_specs=pl.BlockSpec((C_out, tile_m), lambda i: (0, i)),
        ),
        compiler_params=pltpu.CompilerParams(
            dimension_semantics=("parallel",)),
    )(x2d, w, scale, shift)

    out2d = out2d[:, :M]
    return out2d.reshape(C_out, B, H, W).transpose(1, 0, 2, 3)


def mapping_reference(x, w, gamma, beta, running_mean, running_var, eps=1e-5):
    """Pure-JAX reference: 1x1 Conv2d (no bias) + BatchNorm2d in eval mode."""
    y = jnp.einsum('bchw,oc->bohw', x, w)
    inv_std = jax.lax.rsqrt(running_var + eps)
    scale = (gamma * inv_std)[None, :, None, None]
    shift = (beta - running_mean * gamma * inv_std)[None, :, None, None]
    return y * scale + shift


if __name__ == "__main__":
    # Small shapes consistent with the module: Mapping(in_dimension=4, out_dimension=32).
    B, C_in, C_out, H, W = 2, 4, 32, 16, 16

    key = jax.random.PRNGKey(0)
    k1, k2, k3, k4, k5, k6 = jax.random.split(key, 6)

    x = jax.random.normal(k1, (B, C_in, H, W), dtype=jnp.float32)
    # Conv2d(in, out, 1, 1, bias=False) weight has shape (out, in, 1, 1); store squeezed.
    w = jax.random.normal(k2, (C_out, C_in), dtype=jnp.float32) * 0.1
    gamma = 1.0 + 0.1 * jax.random.normal(k3, (C_out,), dtype=jnp.float32)
    beta = 0.1 * jax.random.normal(k4, (C_out,), dtype=jnp.float32)
    running_mean = 0.1 * jax.random.normal(k5, (C_out,), dtype=jnp.float32)
    running_var = jnp.abs(jax.random.normal(k6, (C_out,), dtype=jnp.float32)) + 0.5

    out = mapping_forward(x, w, gamma, beta, running_mean, running_var)
    out = jax.block_until_ready(out)

    ref = mapping_reference(x, w, gamma, beta, running_mean, running_var)
    np.testing.assert_allclose(np.asarray(out), np.asarray(ref), rtol=1e-4, atol=1e-4)

    print("KERNEL_OK")
</pallas_src>

<mosaic_0001>
module attributes {stable_mosaic.version = 11 : i64} {
  func.func @_mapping_kernel(%arg0: i32, %arg1: memref<4x512xf32, #tpu.memory_space<vmem>>, %arg2: memref<32x4xf32, #tpu.memory_space<vmem>>, %arg3: memref<32x1xf32, #tpu.memory_space<vmem>>, %arg4: memref<32x1xf32, #tpu.memory_space<vmem>>, %arg5: memref<32x512xf32, #tpu.memory_space<vmem>>) attributes {dimension_semantics = [#tpu.dimension_semantics<parallel>], iteration_bounds = array<i64: 1>, scalar_prefetch = 0 : i64, scratch_operands = 0 : i64, tpu.core_type = #tpu.core_type<tc>, window_params = [{transform_indices = @transform_0, window_bounds = array<i64: 4, 512>}, {pipeline_mode = #tpu.pipeline_mode<synchronous>, transform_indices = @transform_1, window_bounds = array<i64: 32, 4>}, {pipeline_mode = #tpu.pipeline_mode<synchronous>, transform_indices = @transform_2, window_bounds = array<i64: 32, 1>}, {pipeline_mode = #tpu.pipeline_mode<synchronous>, transform_indices = @transform_3, window_bounds = array<i64: 32, 1>}, {transform_indices = @transform_4, window_bounds = array<i64: 32, 512>}]} {
    %c0 = arith.constant 0 : index
    %c0_0 = arith.constant 0 : index
    %0 = vector.load %arg2[%c0, %c0_0] : memref<32x4xf32, #tpu.memory_space<vmem>>, vector<32x4xf32>
    %c0_1 = arith.constant 0 : index
    %c0_2 = arith.constant 0 : index
    %1 = vector.load %arg3[%c0_1, %c0_2] : memref<32x1xf32, #tpu.memory_space<vmem>>, vector<32x1xf32>
    %2 = vector.broadcast %1 : vector<32x1xf32> to vector<32x4xf32>
    %3 = arith.mulf %0, %2 : vector<32x4xf32>
    %c0_3 = arith.constant 0 : index
    %c0_4 = arith.constant 0 : index
    %4 = vector.load %arg1[%c0_3, %c0_4] : memref<4x512xf32, #tpu.memory_space<vmem>>, vector<4x512xf32>
    %cst = arith.constant dense<0.000000e+00> : vector<32x512xf32>
    %5 = tpu.matmul %3, %4, %cst {dimension_numbers = #tpu.dot_dimension_numbers<[1], [0], [0], [1], [0, 0, 1, 1], [], []>} : vector<32x4xf32>, vector<4x512xf32>, vector<32x512xf32> -> vector<32x512xf32>
    %c0_5 = arith.constant 0 : index
    %c0_6 = arith.constant 0 : index
    %6 = vector.load %arg4[%c0_5, %c0_6] : memref<32x1xf32, #tpu.memory_space<vmem>>, vector<32x1xf32>
    %7 = vector.broadcast %6 : vector<32x1xf32> to vector<32x512xf32>
    %8 = arith.addf %5, %7 : vector<32x512xf32>
    %c0_7 = arith.constant 0 : index
    %c0_8 = arith.constant 0 : index
    %9 = vector.load %arg5[%c0_7, %c0_8] : memref<32x512xf32, #tpu.memory_space<vmem>>, vector<32x512xf32>
    tpu.vector_store %arg5[%c0_7, %c0_8], %8 {strides = array<i32>} : memref<32x512xf32, #tpu.memory_space<vmem>>, vector<32x512xf32>,
    return
  }
  func.func @transform_0(%arg0: i32) -> (i32, i32) {
    %c0_i32 = arith.constant 0 : i32
    %c0_i32_0 = arith.constant 0 : i32
    return %c0_i32, %arg0 : i32, i32
  }
  func.func @transform_1(%arg0: i32) -> (i32, i32) {
    %c0_i32 = arith.constant 0 : i32
    %c0_i32_0 = arith.constant 0 : i32
    %c0_i32_1 = arith.constant 0 : i32
    return %c0_i32, %c0_i32_0 : i32, i32
  }
  func.func @transform_2(%arg0: i32) -> (i32, i32) {
    %c0_i32 = arith.constant 0 : i32
    %c0_i32_0 = arith.constant 0 : i32
    %c0_i32_1 = arith.constant 0 : i32
    return %c0_i32, %c0_i32_0 : i32, i32
  }
  func.func @transform_3(%arg0: i32) -> (i32, i32) {
    %c0_i32 = arith.constant 0 : i32
    %c0_i32_0 = arith.constant 0 : i32
    %c0_i32_1 = arith.constant 0 : i32
    return %c0_i32, %c0_i32_0 : i32, i32
  }
  func.func @transform_4(%arg0: i32) -> (i32, i32) {
    %c0_i32 = arith.constant 0 : i32
    %c0_i32_0 = arith.constant 0 : i32
    return %c0_i32, %arg0 : i32, i32
  }
}

</mosaic_0001>

<llo_original>
// kernel: tpu_custom_call.1
$region0: #{tpu_custom_call.1}
  #allocation0 [shape = 'u32[]', space=smem, size = 0x4, offset = 0x4, fixed_abs, tag = 'smem constant byte address 0x4 - core index']
  #allocation1 [shape = 'u32[144,128]{1,0:T(1,128)}', space=vmem, size = 0x12000, scoped, tag = 'internal scratch']
  %s0 = inlined_call_operand.vmem [shape: f32[4,512], index: 0, kind: input, shape index: {}]
  %s1 = inlined_call_operand.vmem [shape: f32[32,4], index: 1, kind: input, shape index: {}]
  %s2 = inlined_call_operand.vmem [shape: f32[32,1], index: 2, kind: input, shape index: {}]
  %s3 = inlined_call_operand.vmem [shape: f32[32,1], index: 3, kind: input, shape index: {}]
  %s4 = inlined_call_operand.hbm [shape: f32[32,512], index: 4, kind: output, shape index: {}]
  %s5 = sld [smem:[#allocation0]]
  $region26: #{tpu_custom_call.1} parent=0
    _
  %s7 = ssub.s32 1, %s5
  %s8 = scalar_select 0, %s7, %s5
  $region1: #{tpu_custom_call.1} parent=0
    #allocation2 [shape = 'u8[65536]{0}', space=vmem, size = 0x10000, scoped, tag = 'output window, operand 0, single buffered']
    #allocation3 [shape = 's32[1]{0}', space=sflag, size = 0x4, scoped, tag = 'scoped memory for tpu_custom_call.1']
    %9 = vsyncpa [#allocation3], 0
    // Predicated region
    $region2: #{tpu_custom_call.1} parent=1 // pred_check
      _
    $region3: #{tpu_custom_call.1} parent=1 // pred_check_branch
      %11 = sbr.rel (0) target = $region5
    $region4: #{tpu_custom_call.1} parent=1 // pred_region
      _
    $region5: #{tpu_custom_call.1} parent=1 // pred_fallthru
      _
    // Predicated region
    $region6: #{tpu_custom_call.1} parent=1 // pred_check
      _
    $region7: #{tpu_custom_call.1} parent=1 // pred_check_branch
      %13 = sbr.rel (0) target = $region9
    $region8: #{tpu_custom_call.1} parent=1 // pred_region
      _
    $region9: #{tpu_custom_call.1} parent=1 // pred_fallthru
      _
    // Predicated region
    $region10: #{tpu_custom_call.1} parent=1 // pred_check
      _
    $region11: #{tpu_custom_call.1} parent=1 // pred_check_branch
      %15 = sbr.rel (0) target = $region13
    $region12: #{tpu_custom_call.1} parent=1 // pred_region
      _
    $region13: #{tpu_custom_call.1} parent=1 // pred_fallthru
      _
    // Predicated region
    $region14: #{tpu_custom_call.1} parent=1 // pred_check
      _
    $region15: #{tpu_custom_call.1} parent=1 // pred_check_branch
      %17 = sbr.rel (0) target = $region17
    $region16: #{tpu_custom_call.1} parent=1 // pred_region
      _
    $region17: #{tpu_custom_call.1} parent=1 // pred_fallthru
      _
    %v18 = vld [vmem:[%s1] sm:$0xff]
    %v19 = vld [vmem:[%s1 + $0x8] sm:$0xff]
    %v20 = vld [vmem:[%s1 + $0x10] sm:$0xff]
    %v21 = vld [vmem:[%s1 + $0x18] sm:$0xff]
    %v22 = vld [vmem:[%s2] sm:$0xff]
    %v23 = vld [vmem:[%s2 + $0x8] sm:$0xff]
    %v24 = vld [vmem:[%s2 + $0x10] sm:$0xff]
    %v25 = vld [vmem:[%s2 + $0x18] sm:$0xff]
    %27 = vset.pattern.permute.xlu0 0
    %28 = vperm.xlu0 %27, %v22
    %v29 = vpop.permute.xlu0 %28
    %32 = vset.pattern.permute.xlu0 0
    %33 = vperm.xlu0 %32, %v23
    %v34 = vpop.permute.xlu0 %33
    %37 = vset.pattern.permute.xlu0 0
    %38 = vperm.xlu0 %37, %v24
    %v39 = vpop.permute.xlu0 %38
    %42 = vset.pattern.permute.xlu0 0
    %43 = vperm.xlu0 %42, %v25
    %v44 = vpop.permute.xlu0 %43
    %v46 = vmul.f32 %v18, %v29
    %v47 = vmul.f32 %v19, %v34
    %v48 = vmul.f32 %v20, %v39
    %v49 = vmul.f32 %v21, %v44
    %v50 = vld [vmem:[%s0] sm:$0xff]
    %v51 = vld [vmem:[%s0 + $0x8] sm:$0xff]
    %v52 = vld [vmem:[%s3] sm:$0xff]
    %v53 = vld [vmem:[%s3 + $0x8] sm:$0xff]
    %v54 = vld [vmem:[%s3 + $0x10] sm:$0xff]
    %v55 = vld [vmem:[%s3 + $0x18] sm:$0xff]
    %57 = vset.pattern.permute.xlu0 0
    %58 = vperm.xlu0 %57, %v52
    %v59 = vpop.permute.xlu0 %58
    %62 = vset.pattern.permute.xlu0 0
    %63 = vperm.xlu0 %62, %v53
    %v64 = vpop.permute.xlu0 %63
    %67 = vset.pattern.permute.xlu0 0
    %68 = vperm.xlu0 %67, %v54
    %v69 = vpop.permute.xlu0 %68
    %72 = vset.pattern.permute.xlu0 0
    %73 = vperm.xlu0 %72, %v55
    %v74 = vpop.permute.xlu0 %73
    %v78 = vcombine.high %v50, %v50
    %v79 = vcombine.high %v51, %v51
    %vm80 = vcmask 31744
    %v82 = vsel %vm80, %v46, 0
    %v85 = vsel %vm80, %v47, 0
    %v88 = vsel %vm80, %v48, 0
    %v91 = vsel %vm80, %v49, 0
    %vm93 = vcmask 1043456
    %v94 = vsel %vm93, %v50, 0
    %v96 = vsel %vm93, %v78, 0
    %v98 = vsel %vm93, %v51, 0
    %v100 = vsel %vm93, %v79, 0
    %102 = vmatprep.subr.mxu0 0.0
    %103 = vmatpush1.msra.mxu0 0.0
    %104 = vmatprep.subr.mxu0 0.0
    %105 = vmatpush1.msra.mxu0 0.0
    %106 = vmatprep.subr.mxu0 0.0
    %107 = vmatpush1.msra.mxu0 0.0
    %108 = vmatprep.subr.mxu0 0.0
    %109 = vmatpush1.msra.mxu0 0.0
    %110 = vmatprep.subr.mxu0 0.0
    %111 = vmatpush1.msra.mxu0 0.0
    %112 = vmatprep.subr.mxu0 0.0
    %113 = vmatpush1.msra.mxu0 0.0
    %114 = vmatprep.subr.mxu0 0.0
    %115 = vmatpush1.msra.mxu0 0.0
    %116 = vmatprep.subr.mxu0 0.0
    %117 = vmatpush1.msra.mxu0 0.0
    %118 = vmatprep.subr.mxu0 0.0
    %119 = vmatpush1.msra.mxu0 0.0
    %120 = vmatprep.subr.mxu0 0.0
    %121 = vmatpush1.msra.mxu0 0.0
    %122 = vmatprep.subr.mxu0 0.0
    %123 = vmatpush1.msra.mxu0 0.0
    %124 = vmatprep.subr.mxu0 0.0
    %125 = vmatpush1.msra.mxu0 0.0
    %126 = vmatprep.subr.mxu0 0.0
    %127 = vmatpush1.msra.mxu0 0.0
    %128 = vmatprep.subr.mxu0 0.0
    %129 = vmatpush1.msra.mxu0 0.0
    %130 = vmatprep.subr.mxu0 0.0
    %131 = vmatpush1.msra.mxu0 0.0
    %132 = vmatprep.subr.mxu0 %v96
    %133 = vmatpush1.msra.mxu0 %v94
    %134 = vmatprep.subr.mxu0 0.0
    %135 = vmatpush2.msra.mxu0 0.0
    %136 = vmatprep.subr.mxu0 0.0
    %137 = vmatpush2.msra.mxu0 0.0
    %138 = vmatprep.subr.mxu0 0.0
    %139 = vmatpush2.msra.mxu0 0.0
    %140 = vmatprep.subr.mxu0 0.0
    %141 = vmatpush2.msra.mxu0 0.0
    %142 = vmatprep.subr.mxu0 0.0
    %143 = vmatpush2.msra.mxu0 0.0
    %144 = vmatprep.subr.mxu0 0.0
    %145 = vmatpush2.msra.mxu0 0.0
    %146 = vmatprep.subr.mxu0 0.0
    %147 = vmatpush2.msra.mxu0 0.0
    %148 = vmatprep.subr.mxu0 0.0
    %149 = vmatpush2.msra.mxu0 0.0
    %150 = vmatprep.subr.mxu0 0.0
    %151 = vmatpush2.msra.mxu0 0.0
    %152 = vmatprep.subr.mxu0 0.0
    %153 = vmatpush2.msra.mxu0 0.0
    %154 = vmatprep.subr.mxu0 0.0
    %155 = vmatpush2.msra.mxu0 0.0
    %156 = vmatprep.subr.mxu0 0.0
    %157 = vmatpush2.msra.mxu0 0.0
    %158 = vmatprep.subr.mxu0 0.0
    %159 = vmatpush2.msra.mxu0 0.0
    %160 = vmatprep.subr.mxu0 0.0
    %161 = vmatpush2.msra.mxu0 0.0
    %162 = vmatprep.subr.mxu0 0.0
    %163 = vmatpush2.msra.mxu0 0.0
    %164 = vmatprep.subr.mxu0 0.0
    %165 = vmatpush2.msra.mxu0 0.0
    %166 = vmatprep.mubr.f32.mxu0 0.0
    %167 = vmatmul.mubr.f32.gmra.mxu0 %v82
    %v168 = vpop.f32.mrf.mxu0
    %v169 = vadd.f32 %v59, %v168
    %v170 = vpop.f32.mrf.mxu0
    %v171 = vadd.f32 %v59, %v170
    %172 = vmatprep.mubr.f32.mxu0 0.0
    %173 = vmatmul.mubr.f32.gmra.mxu0 %v85
    %v174 = vpop.f32.mrf.mxu0
    %v175 = vadd.f32 %v64, %v174
    %v176 = vpop.f32.mrf.mxu0
    %v177 = vadd.f32 %v64, %v176
    %178 = vmatprep.mubr.f32.mxu0 0.0
    %179 = vmatmul.mubr.f32.gmra.mxu0 %v88
    %v180 = vpop.f32.mrf.mxu0
    %v181 = vadd.f32 %v69, %v180
    %v182 = vpop.f32.mrf.mxu0
    %v183 = vadd.f32 %v69, %v182
    %184 = vmatprep.mubr.f32.mxu0 0.0
    %185 = vmatmul.mubr.f32.gmra.mxu0 %v91
    %v186 = vpop.f32.mrf.mxu0
    %v187 = vadd.f32 %v74, %v186
    %v188 = vpop.f32.mrf.mxu0
    %v189 = vadd.f32 %v74, %v188
    %190 = vdwg.mxu0
    %191 = vmatprep.subr.mxu0 0.0
    %192 = vmatpush1.msra.mxu0 0.0
    %193 = vmatprep.subr.mxu0 0.0
    %194 = vmatpush1.msra.mxu0 0.0
    %195 = vmatprep.subr.mxu0 0.0
    %196 = vmatpush1.msra.mxu0 0.0
    %197 = vmatprep.subr.mxu0 0.0
    %198 = vmatpush1.msra.mxu0 0.0
    %199 = vmatprep.subr.mxu0 0.0
    %200 = vmatpush1.msra.mxu0 0.0
    %201 = vmatprep.subr.mxu0 0.0
    %202 = vmatpush1.msra.mxu0 0.0
    %203 = vmatprep.subr.mxu0 0.0
    %204 = vmatpush1.msra.mxu0 0.0
    %205 = vmatprep.subr.mxu0 0.0
    %206 = vmatpush1.msra.mxu0 0.0
    %207 = vmatprep.subr.mxu0 0.0
    %208 = vmatpush1.msra.mxu0 0.0
    %209 = vmatprep.subr.mxu0 0.0
    %210 = vmatpush1.msra.mxu0 0.0
    %211 = vmatprep.subr.mxu0 0.0
    %212 = vmatpush1.msra.mxu0 0.0
    %213 = vmatprep.subr.mxu0 0.0
    %214 = vmatpush1.msra.mxu0 0.0
    %215 = vmatprep.subr.mxu0 0.0
    %216 = vmatpush1.msra.mxu0 0.0
    %217 = vmatprep.subr.mxu0 0.0
    %218 = vmatpush1.msra.mxu0 0.0
    %219 = vmatprep.subr.mxu0 0.0
    %220 = vmatpush1.msra.mxu0 0.0
    %221 = vmatprep.subr.mxu0 %v100
    %222 = vmatpush1.msra.mxu0 %v98
    %223 = vmatprep.subr.mxu0 0.0
    %224 = vmatpush2.msra.mxu0 0.0
    %225 = vmatprep.subr.mxu0 0.0
    %226 = vmatpush2.msra.mxu0 0.0
    %227 = vmatprep.subr.mxu0 0.0
    %228 = vmatpush2.msra.mxu0 0.0
    %229 = vmatprep.subr.mxu0 0.0
    %230 = vmatpush2.msra.mxu0 0.0
    %231 = vmatprep.subr.mxu0 0.0
    %232 = vmatpush2.msra.mxu0 0.0
    %233 = vmatprep.subr.mxu0 0.0
    %234 = vmatpush2.msra.mxu0 0.0
    %235 = vmatprep.subr.mxu0 0.0
    %236 = vmatpush2.msra.mxu0 0.0
    %237 = vmatprep.subr.mxu0 0.0
    %238 = vmatpush2.msra.mxu0 0.0
    %239 = vmatprep.subr.mxu0 0.0
    %240 = vmatpush2.msra.mxu0 0.0
    %241 = vmatprep.subr.mxu0 0.0
    %242 = vmatpush2.msra.mxu0 0.0
    %243 = vmatprep.subr.mxu0 0.0
    %244 = vmatpush2.msra.mxu0 0.0
    %245 = vmatprep.subr.mxu0 0.0
    %246 = vmatpush2.msra.mxu0 0.0
    %247 = vmatprep.subr.mxu0 0.0
    %248 = vmatpush2.msra.mxu0 0.0
    %249 = vmatprep.subr.mxu0 0.0
    %250 = vmatpush2.msra.mxu0 0.0
    %251 = vmatprep.subr.mxu0 0.0
    %252 = vmatpush2.msra.mxu0 0.0
    %253 = vmatprep.subr.mxu0 0.0
    %254 = vmatpush2.msra.mxu0 0.0
    %255 = vmatprep.mubr.f32.mxu0 0.0
    %256 = vmatmul.mubr.f32.gmra.mxu0 %v82
    %v257 = vpop.f32.mrf.mxu0
    %v258 = vadd.f32 %v59, %v257
    %v259 = vpop.f32.mrf.mxu0
    %v260 = vadd.f32 %v59, %v259
    %261 = vmatprep.mubr.f32.mxu0 0.0
    %262 = vmatmul.mubr.f32.gmra.mxu0 %v85
    %v263 = vpop.f32.mrf.mxu0
    %v264 = vadd.f32 %v64, %v263
    %v265 = vpop.f32.mrf.mxu0
    %v266 = vadd.f32 %v64, %v265
    %267 = vmatprep.mubr.f32.mxu0 0.0
    %268 = vmatmul.mubr.f32.gmra.mxu0 %v88
    %v269 = vpop.f32.mrf.mxu0
    %v270 = vadd.f32 %v69, %v269
    %v271 = vpop.f32.mrf.mxu0
    %v272 = vadd.f32 %v69, %v271
    %273 = vmatprep.mubr.f32.mxu0 0.0
    %274 = vmatmul.mubr.f32.gmra.mxu0 %v91
    %v275 = vpop.f32.mrf.mxu0
    %v276 = vadd.f32 %v74, %v275
    %v277 = vpop.f32.mrf.mxu0
    %v278 = vadd.f32 %v74, %v277
    %279 = vdwg.mxu0
    %280 = vst [vmem:[#allocation2] sm:$0xff] %v169
    %281 = vst [vmem:[#allocation2 + $0x8] sm:$0xff] %v171
    %282 = vst [vmem:[#allocation2 + $0x10] sm:$0xff] %v258
    %283 = vst [vmem:[#allocation2 + $0x18] sm:$0xff] %v260
    %284 = vst [vmem:[#allocation2 + $0x20] sm:$0xff] %v175
    %285 = vst [vmem:[#allocation2 + $0x28] sm:$0xff] %v177
    %286 = vst [vmem:[#allocation2 + $0x30] sm:$0xff] %v264
    %287 = vst [vmem:[#allocation2 + $0x38] sm:$0xff] %v266
    %288 = vst [vmem:[#allocation2 + $0x40] sm:$0xff] %v181
    %289 = vst [vmem:[#allocation2 + $0x48] sm:$0xff] %v183
    %290 = vst [vmem:[#allocation2 + $0x50] sm:$0xff] %v270
    %291 = vst [vmem:[#allocation2 + $0x58] sm:$0xff] %v272
    %292 = vst [vmem:[#allocation2 + $0x60] sm:$0xff] %v187
    %293 = vst [vmem:[#allocation2 + $0x68] sm:$0xff] %v189
    %294 = vst [vmem:[#allocation2 + $0x70] sm:$0xff] %v276
    %295 = vst [vmem:[#allocation2 + $0x78] sm:$0xff] %v278
    // Predicated region
    $region18: #{tpu_custom_call.1} parent=1 // pred_check
      _
    $region19: #{tpu_custom_call.1} parent=1 // pred_check_branch
      %297 = sbr.rel (0) target = $region21
    $region20: #{tpu_custom_call.1} parent=1 // pred_region
      %s299 = ssub.s32 2048, 2048
      %300 = vsyncadd [#allocation3], %s299
      %s301 = sshll.u32 [#allocation2], 4
      %s302 = int_to_ptr.vmem [resolvable:$true] %s301
      %307 = dma.vmem_to_hbm [thread:$0]  %s302, 2048, %s4, [#allocation3], 512, 512, 32
    $region21: #{tpu_custom_call.1} parent=1 // pred_fallthru
      _
    // Predicated region
    $region22: #{tpu_custom_call.1} parent=1 // pred_check
      _
    $region23: #{tpu_custom_call.1} parent=1 // pred_check_branch
      %309 = sbr.rel (0) target = $region25
    $region24: #{tpu_custom_call.1} parent=1 // pred_region
      %310 = dma.done [#allocation3], 2048
    $region25: #{tpu_custom_call.1} parent=1 // pred_fallthru
      _
    %311 = vsyncpa [#allocation3], 1

</llo_original>
